<compile_context>
chip_gen: v7x
topology: tpu7x:2x2x1
jax: 0.10.0
libtpu: 0.0.40
codegen_flags: <defaults>
</compile_context>

<pallas_src>
import math
import functools

import jax
import jax.numpy as jnp
from jax.experimental import pallas as pl
from jax.experimental.pallas import tpu as pltpu

# ----------------------------- configuration -----------------------------
B = 2                 # batch
T = 16                # input sequence length
INPUT_DIM = 8         # CSI feature channels (small stand-in for 90)
NUM_CLASSES = 6
D_LLM = 128           # LLM hidden size (small stand-in for GPT-2's 768)
N_HEADS = 8
TRANS_LAYER = 4       # NB: passed as head_dim to TimeEncoder in the original code
HEAD_DIM = TRANS_LAYER
NUM_ENCODER = 4       # TimeEncoder default num_encoder
TOKEN_KERNELS = [3, 7, 15]
VOCAB = 256           # small stand-in vocab
NUM_TOKENS = 32       # small stand-in for num_tokens=1000
REDUCE_RATIO = 1      # default -> is_reduce_time False -> conv_reduce branch skipped
HEAD_PAD = 128        # classification head padded to a lane-dense width
PROMPT_LEN = 6        # stand-in for tokenized be_prompt length

_PAR1 = pltpu.CompilerParams(dimension_semantics=("parallel",))


def _full_spec(arr):
    # Batch-invariant block (constant block index) -> Pallas does not re-DMA it across
    # grid steps.  At real (GPT-2) sizes these specs should additionally be
    # single-buffered (pipeline_mode=pl.Buffered(1)) and vmem_limit_bytes raised; at
    # these toy sizes the double-buffered weight total is < 3 MiB so defaults are kept.
    nd = arr.ndim
    return pl.BlockSpec(arr.shape, lambda *_: (0,) * nd)


# ----------------------------- in-kernel helpers -----------------------------
def _ln(x, g2d, b2d, eps=1e-5):
    mu = jnp.mean(x, axis=-1, keepdims=True)
    xc = x - mu
    var = jnp.mean(xc * xc, axis=-1, keepdims=True)
    return xc * jax.lax.rsqrt(var + eps) * g2d + b2d


def _mm(a, w):
    # bf16 MXU operands, f32 accumulation
    return jnp.dot(a.astype(jnp.bfloat16), w.astype(jnp.bfloat16),
                   preferred_element_type=jnp.float32)


def _mm_t(a, b):
    # a @ b.T without materialising the transpose
    return jax.lax.dot_general(a.astype(jnp.bfloat16), b.astype(jnp.bfloat16),
                               (((1,), (1,)), ((), ())),
                               preferred_element_type=jnp.float32)


def _softmax_last(s):
    m = jnp.max(s, axis=-1, keepdims=True)
    p = jnp.exp(s - m)
    return p * pl.reciprocal(jnp.sum(p, axis=-1, keepdims=True), approx=True)


def _gelu(x):
    # TODO(synk): torch nn.GELU() is exact-erf; tanh approximation used for TPU lowering.
    return jax.nn.gelu(x, approximate=True)


# ------------------- reprogramming K/V precompute (input independent) -------------------
def _reprog_kv_kernel(mapw_ref, emb_ref, mapb_ref, sg_ref, sb_ref,
                      wk_ref, bk_ref, wv_ref, bv_ref, k_out, v_out, acc_ref):
    @pl.when(pl.program_id(0) == 0)
    def _():
        acc_ref[...] = jnp.zeros_like(acc_ref)

    acc_ref[...] += jnp.dot(mapw_ref[...].astype(jnp.bfloat16),
                            emb_ref[...].astype(jnp.bfloat16),
                            preferred_element_type=jnp.float32)

    @pl.when(pl.program_id(0) == pl.num_programs(0) - 1)
    def _():
        src = acc_ref[...] + mapb_ref[...]                 # source_embeddings (S, D)
        srcn = _ln(src, sg_ref[...], sb_ref[...])          # source_norm
        k_out[...] = (_mm(srcn, wk_ref[...]) + bk_ref[...]).astype(k_out.dtype)
        v_out[...] = (_mm(srcn, wv_ref[...]) + bv_ref[...]).astype(v_out.dtype)


def reprog_kv_precompute(map_w, map_b, word_emb, sn_g, sn_b, wk, bk, wv, bv, tk=128):
    # source_embeddings = mapping_layer(word_embeddings.T).T == map_w @ word_emb + map_b
    # followed by source_norm and K/V projections -> all input independent, run ONCE.
    S, V = map_w.shape
    D = word_emb.shape[1]
    dko = wk.shape[1]
    n_tiles = pl.cdiv(V, tk)
    v_pad = n_tiles * tk
    if v_pad != V:        # zero-pad the contraction so a non-divisible vocab stays exact
        map_w = jnp.pad(map_w, ((0, 0), (0, v_pad - V)))
        word_emb = jnp.pad(word_emb, ((0, v_pad - V), (0, 0)))
    consts = [map_b.reshape(S, 1), sn_g, sn_b, wk, bk, wv, bv]
    return pl.pallas_call(
        _reprog_kv_kernel,
        out_shape=(jax.ShapeDtypeStruct((S, dko), jnp.bfloat16),
                   jax.ShapeDtypeStruct((S, dko), jnp.bfloat16)),
        grid=(n_tiles,),
        in_specs=[pl.BlockSpec((S, tk), lambda k: (0, k)),
                  pl.BlockSpec((tk, D), lambda k: (k, 0))] +
                 [_full_spec(a) for a in consts],
        out_specs=(pl.BlockSpec((S, dko), lambda k: (0, 0)),
                   pl.BlockSpec((S, dko), lambda k: (0, 0))),
        scratch_shapes=[pltpu.VMEM((S, D), jnp.float32)],
        compiler_params=pltpu.CompilerParams(dimension_semantics=("arbitrary",)),
    )(map_w, word_emb, *consts)


# ----------------------------- single fused forward kernel -----------------------------
def _fused_forward_kernel(x_ref, *refs, n_layers, heads, head_dim, d_keys,
                          widest, use_reprog, add_origin):
    embeds_out, logits_out = refs[-2], refs[-1]
    it = iter(refs[:-2])
    nxt = lambda: next(it)[...]

    # -------- token embedding: one im2col + one folded (3 convs || token_linear) matmul
    x = x_ref[0].astype(jnp.float32)                       # (T, C)
    t_len = x.shape[0]
    pad = widest // 2
    xp = jnp.concatenate([x[t_len - pad:], x, x[:pad]], axis=0)        # circular pad
    patches = jnp.concatenate([xp[j:j + t_len] for j in range(widest)], axis=-1)
    w_emb, b_emb, ln_g, ln_b, pe = nxt(), nxt(), nxt(), nxt(), nxt()
    h = _mm(patches, w_emb) + b_emb                        # folded conv + Linear
    h = _gelu(h)
    h = _ln(h, ln_g, ln_b)                                 # token_linear LayerNorm
    h = h + pe                                             # additive sinusoidal PE (assumed)

    # -------- TimeEncoder: unrolled Encoder (+ DowmLayer) stack --------
    for li in range(n_layers):
        (ln1g, ln1b, wqkv, wo, bo,
         ln2g, ln2b, w1, b1, w2, b2) = (nxt() for _ in range(11))
        seq, dim = h.shape
        hdh = heads * head_dim
        scale = 1.0 / math.sqrt(dim)                       # /sqrt(embed_size), as in torch

        hn = _ln(h, ln1g, ln1b)
        qkv = _mm(hn, wqkv)                                # fused QKV, (L, 3*H*Dh)
        attn = jnp.zeros((seq, dim), jnp.float32)
        for hh in range(heads):                            # out-proj folded into head loop
            q_h = qkv[:, hh * head_dim:(hh + 1) * head_dim]
            k_h = qkv[:, hdh + hh * head_dim:hdh + (hh + 1) * head_dim]
            v_h = qkv[:, 2 * hdh + hh * head_dim:2 * hdh + (hh + 1) * head_dim]
            a = _softmax_last(_mm_t(q_h, k_h) * scale)     # (L, L)
            attn = attn + _mm(_mm(a, v_h), wo[hh * head_dim:(hh + 1) * head_dim, :])
        h = h + attn + bo                                  # x + MHA(LN1(x))

        hn2 = _ln(h, ln2g, ln2b)
        m = _gelu(_mm(hn2, w1) + b1)
        h = h + _mm(m, w2) + b2                            # x + MLP(LN2(x))

        if li < n_layers - 1:                              # DowmLayer: conv k=3 s=2 p=1
            wd, sel = nxt(), nxt()
            half = seq // 2
            zero = jnp.zeros((1, dim), jnp.float32)
            xpad = jnp.concatenate([zero, h, zero], axis=0)            # (L+2, D)
            taps = _mm(sel, xpad)          # constant stride-2 row gather done on the MXU
            h = (_mm(taps[0:half], wd[0:dim]) +
                 _mm(taps[half:2 * half], wd[dim:2 * dim]) +
                 _mm(taps[2 * half:3 * half], wd[2 * dim:3 * dim]))

    # -------- ReprogrammingLayer (K/V precomputed offline; batch-invariant) --------
    if use_reprog:
        tg, tb, wq, bq, k_src, v_src, wo_r, bo_r = (nxt() for _ in range(8))
        seq, dim = h.shape
        q = _mm(_ln(h, tg, tb), wq) + bq                   # (L, H*dk)
        rscale = 1.0 / math.sqrt(d_keys)
        rep = jnp.zeros((seq, dim), jnp.float32)
        parts = []
        for hh in range(heads):
            sl = slice(hh * d_keys, (hh + 1) * d_keys)
            a = _softmax_last(_mm_t(q[:, sl], k_src[:, sl]) * rscale)  # (L, S)
            o_h = _mm(a, v_src[:, sl])                                  # (L, dk)
            rep = rep + _mm(o_h, wo_r[sl, :])              # out-proj folded into head loop
            if add_origin:
                parts.append(o_h)
        h = rep + bo_r
        if add_origin:
            h = h + jnp.concatenate(parts, axis=-1)

    # -------- assemble inputs_embeds = [be_prompt | x1 | stop_token] --------
    be, stop, head_w, head_b = nxt(), nxt(), nxt(), nxt()
    seq_embeds = jnp.concatenate([be, h, stop], axis=0)    # (P + L + 1, D), lane-dense
    embeds_out[0] = seq_embeds.astype(embeds_out.dtype)
    # TODO(synk): pretrained GPT-2/Llama backbone (llm_model(inputs_embeds=...)) needs a
    # checkpoint; treated as identity, so the "last hidden state" is the stop-token row.
    last = seq_embeds[seq_embeds.shape[0] - 1:, :]         # (1, D)
    logits_out[0] = (_mm(last, head_w) + head_b).astype(logits_out.dtype)


def llm2rec_forward(params, x, reprogramming=True, add_origin=False):
    bsz, t_len, c_in = x.shape
    d = D_LLM
    widest = max(TOKEN_KERNELS)
    n_layers = len(params["csi_layers"])
    l_final = t_len >> (n_layers - 1)
    # TODO(synk): HuggingFace tokenizer has no Pallas equivalent; prompt token ids are
    # fixed deterministic integers looked up once in the synthetic embedding table.
    be = params["word_embeddings"][params["be_prompt_ids"]]            # (P, D), batch-invariant
    # af_prompt_embed is computed but never used by the original forward; skipped.
    seq_total = be.shape[0] + l_final + 1

    weights = [params["embed_fused_w"], params["embed_b"],
               params["tok_ln_g"], params["tok_ln_b"], params["pe"]]
    for i, lay in enumerate(params["csi_layers"]):
        weights += [lay["ln1_g"], lay["ln1_b"], lay["wqkv"], lay["wo"], lay["bo"],
                    lay["ln2_g"], lay["ln2_b"], lay["w1"], lay["b1"], lay["w2"], lay["b2"]]
        if i < n_layers - 1:
            weights += [lay["w_down"], lay["down_sel"]]
    if reprogramming:
        rp = params["reprog"]
        weights += [rp["tnorm_g"], rp["tnorm_b"], rp["wq"], rp["bq"],
                    params["reprog_k"], params["reprog_v"], rp["wo"], rp["bo"]]
    weights += [be, params["stop_token"], params["head_w"], params["head_b"]]

    kern = functools.partial(
        _fused_forward_kernel, n_layers=n_layers, heads=N_HEADS, head_dim=HEAD_DIM,
        d_keys=d // N_HEADS, widest=widest, use_reprog=reprogramming,
        add_origin=add_origin)

    embeds, logits = pl.pallas_call(
        kern,
        out_shape=(jax.ShapeDtypeStruct((bsz, seq_total, d), jnp.float32),
                   jax.ShapeDtypeStruct((bsz, 1, HEAD_PAD), jnp.float32)),
        grid=(bsz,),
        in_specs=[pl.BlockSpec((1, t_len, c_in), lambda b: (b, 0, 0))] +
                 [_full_spec(w) for w in weights],
        out_specs=(pl.BlockSpec((1, seq_total, d), lambda b: (b, 0, 0)),
                   pl.BlockSpec((1, 1, HEAD_PAD), lambda b: (b, 0, 0))),
        compiler_params=_PAR1,
    )(x, *weights)
    return logits[:, 0, :NUM_CLASSES], embeds


# ----------------------------- offline parameter preparation -----------------------------
def sinusoidal_pe(length, d):
    pos = jnp.arange(length, dtype=jnp.float32)[:, None]
    div = jnp.exp(jnp.arange(0, d, 2, dtype=jnp.float32) * (-math.log(10000.0) / d))
    pe = jnp.zeros((length, d), jnp.float32)
    pe = pe.at[:, 0::2].set(jnp.sin(pos * div))
    pe = pe.at[:, 1::2].set(jnp.cos(pos * div))
    return pe


def _fold_embed_weights(conv_ws, tok_lin_w, kernels, c_in):
    # conv_ws[i]: torch Conv1d weight (Cout_i, Cin, K_i) (circular pad, bias=False).
    # Place each kernel's taps at its offset inside the widest kernel's im2col, then fold
    # the concat + token_linear Linear into a single (widest*C, D) matrix (offline).
    widest = max(kernels)
    blocks = []
    for w, k in zip(conv_ws, kernels):
        cout = w.shape[0]
        full = jnp.zeros((widest * c_in, cout), jnp.float32)
        off = widest // 2 - k // 2
        for j in range(k):
            full = full.at[(off + j) * c_in:(off + j + 1) * c_in, :].set(w[:, :, j].T)
        blocks.append(full)
    w_all = jnp.concatenate(blocks, axis=1)               # (widest*C, sum_dims)
    return (w_all @ tok_lin_w).astype(jnp.bfloat16)       # (widest*C, D)


def _down_select(seq_len):
    # Constant 0/1 matrix implementing the DowmLayer k=3, stride=2, pad=1 tap gather:
    # row [j*half + t] picks xpad[2t + j].  Built offline; applied in-kernel via the MXU.
    half = seq_len // 2
    rows = jnp.arange(3 * half)
    j_idx = rows // half
    t_idx = rows % half
    target = 2 * t_idx + j_idx
    cols = jnp.arange(seq_len + 2)
    return (cols[None, :] == target[:, None]).astype(jnp.bfloat16)


def init_params(key):
    keys = iter(jax.random.split(key, 128))

    def nrm(shape, std=0.02):
        return jax.random.normal(next(keys), shape, jnp.float32) * std

    d, c = D_LLM, INPUT_DIM
    bf = jnp.bfloat16
    p = {}

    # --- folded TokenEmbedding (3 circular convs) + token_linear ---
    conv_ws = [nrm((c * k // 2, c, k)) for k in TOKEN_KERNELS]        # torch (Cout, Cin, K)
    sum_dims = sum(c * k // 2 for k in TOKEN_KERNELS)
    tok_lin_w = nrm((sum_dims, d))
    p["embed_fused_w"] = _fold_embed_weights(conv_ws, tok_lin_w, TOKEN_KERNELS, c)
    p["embed_b"] = jnp.zeros((1, d), jnp.float32)         # token_linear Linear bias
    p["tok_ln_g"] = jnp.ones((1, d), jnp.float32)
    p["tok_ln_b"] = jnp.zeros((1, d), jnp.float32)
    p["pe"] = sinusoidal_pe(T, d)       # assumed additive sinusoidal PositionalEmbedding

    # --- TimeEncoder stack ---
    hdh = N_HEADS * HEAD_DIM
    layers = []
    seq_len = T
    for i in range(NUM_ENCODER):
        wq, wk, wv = nrm((d, hdh)), nrm((d, hdh)), nrm((d, hdh))
        enc = {
            "ln1_g": jnp.ones((1, d), jnp.float32), "ln1_b": jnp.zeros((1, d), jnp.float32),
            "wqkv": jnp.concatenate([wq, wk, wv], axis=-1).astype(bf),   # fused QKV weight
            "wo": nrm((hdh, d)).astype(bf), "bo": jnp.zeros((1, d), jnp.float32),
            "ln2_g": jnp.ones((1, d), jnp.float32), "ln2_b": jnp.zeros((1, d), jnp.float32),
            "w1": nrm((d, 4 * d)).astype(bf), "b1": jnp.zeros((1, 4 * d), jnp.float32),
            "w2": nrm((4 * d, d)).astype(bf), "b2": jnp.zeros((1, d), jnp.float32),
        }
        if i < NUM_ENCODER - 1:
            wd = nrm((d, d, 3))                       # DowmLayer Conv1d weight (Cout, Cin, K)
            enc["w_down"] = jnp.transpose(wd, (2, 1, 0)).reshape(3 * d, d).astype(bf)
            enc["down_sel"] = _down_select(seq_len)
            seq_len //= 2
        layers.append(enc)
    p["csi_layers"] = layers

    p["stop_token"] = jnp.zeros((1, d), jnp.float32)      # nn.Parameter(torch.zeros(1,1,D))
    p["word_embeddings"] = nrm((VOCAB, d))
    p["map_w"] = nrm((NUM_TOKENS, VOCAB))                 # torch Linear(vocab, num_tokens).weight
    p["map_b"] = jnp.zeros((NUM_TOKENS,), jnp.float32)

    dk = d // N_HEADS
    p["reprog"] = {
        "tnorm_g": jnp.ones((1, d), jnp.float32), "tnorm_b": jnp.zeros((1, d), jnp.float32),
        "snorm_g": jnp.ones((1, d), jnp.float32), "snorm_b": jnp.zeros((1, d), jnp.float32),
        "wq": nrm((d, N_HEADS * dk)).astype(bf), "bq": jnp.zeros((1, N_HEADS * dk), jnp.float32),
        "wk": nrm((d, N_HEADS * dk)).astype(bf), "bk": jnp.zeros((1, N_HEADS * dk), jnp.float32),
        "wv": nrm((d, N_HEADS * dk)).astype(bf), "bv": jnp.zeros((1, N_HEADS * dk), jnp.float32),
        "wo": nrm((N_HEADS * dk, d)).astype(bf), "bo": jnp.zeros((1, d), jnp.float32),
    }

    # classification head zero-padded to 128 lanes (sliced to NUM_CLASSES outside)
    head_w = jnp.zeros((d, HEAD_PAD), jnp.float32).at[:, :NUM_CLASSES].set(
        nrm((d, NUM_CLASSES)))
    p["head_w"] = head_w.astype(bf)
    p["head_b"] = jnp.zeros((1, HEAD_PAD), jnp.float32)

    p["be_prompt_ids"] = (jnp.arange(PROMPT_LEN) * 13 + 5) % VOCAB
    return p


# ----------------------------- main -----------------------------
if __name__ == "__main__":
    key = jax.random.PRNGKey(0)
    pkey, xkey = jax.random.split(key)
    params = init_params(pkey)

    # Input-independent precompute (runs once, hoisted out of the per-input forward):
    # mapping_layer -> source_norm -> K/V projections of the reprogramming layer.
    rp = params["reprog"]
    params["reprog_k"], params["reprog_v"] = reprog_kv_precompute(
        params["map_w"], params["map_b"], params["word_embeddings"],
        rp["snorm_g"], rp["snorm_b"], rp["wk"], rp["bk"], rp["wv"], rp["bv"])

    x = jax.random.normal(xkey, (B, T, INPUT_DIM), jnp.float32)

    fwd = jax.jit(lambda inp: llm2rec_forward(params, inp, reprogramming=True,
                                              add_origin=False))
    logits, inputs_embeds = fwd(x)
    jax.block_until_ready((logits, inputs_embeds))
    assert logits.shape == (B, NUM_CLASSES), logits.shape
    assert inputs_embeds.shape == (B, PROMPT_LEN + (T >> (NUM_ENCODER - 1)) + 1, D_LLM), \
        inputs_embeds.shape
    assert bool(jnp.all(jnp.isfinite(logits))) and bool(jnp.all(jnp.isfinite(inputs_embeds)))
    print("KERNEL_OK")
</pallas_src>

<mosaic_0001>
module attributes {stable_mosaic.version = 11 : i64} {
  func.func @_reprog_kv_kernel(%arg0: i32, %arg1: memref<32x128xf32, #tpu.memory_space<vmem>>, %arg2: memref<128x128xf32, #tpu.memory_space<vmem>>, %arg3: memref<32x1xf32, #tpu.memory_space<vmem>>, %arg4: memref<1x128xf32, #tpu.memory_space<vmem>>, %arg5: memref<1x128xf32, #tpu.memory_space<vmem>>, %arg6: memref<128x128xbf16, #tpu.memory_space<vmem>>, %arg7: memref<1x128xf32, #tpu.memory_space<vmem>>, %arg8: memref<128x128xbf16, #tpu.memory_space<vmem>>, %arg9: memref<1x128xf32, #tpu.memory_space<vmem>>, %arg10: memref<32x128xbf16, #tpu.memory_space<vmem>>, %arg11: memref<32x128xbf16, #tpu.memory_space<vmem>>, %arg12: memref<32x128xf32, #tpu.memory_space<vmem>>) attributes {dimension_semantics = [#tpu.dimension_semantics<arbitrary>], iteration_bounds = array<i64: 2>, scalar_prefetch = 0 : i64, scratch_operands = 1 : i64, tpu.core_type = #tpu.core_type<tc>, window_params = [{transform_indices = @transform_0, window_bounds = array<i64: 32, 128>}, {transform_indices = @transform_1, window_bounds = array<i64: 128, 128>}, {pipeline_mode = #tpu.pipeline_mode<synchronous>, transform_indices = @transform_2, window_bounds = array<i64: 32, 1>}, {pipeline_mode = #tpu.pipeline_mode<synchronous>, transform_indices = @transform_3, window_bounds = array<i64: 1, 128>}, {pipeline_mode = #tpu.pipeline_mode<synchronous>, transform_indices = @transform_4, window_bounds = array<i64: 1, 128>}, {pipeline_mode = #tpu.pipeline_mode<synchronous>, transform_indices = @transform_5, window_bounds = array<i64: 128, 128>}, {pipeline_mode = #tpu.pipeline_mode<synchronous>, transform_indices = @transform_6, window_bounds = array<i64: 1, 128>}, {pipeline_mode = #tpu.pipeline_mode<synchronous>, transform_indices = @transform_7, window_bounds = array<i64: 128, 128>}, {pipeline_mode = #tpu.pipeline_mode<synchronous>, transform_indices = @transform_8, window_bounds = array<i64: 1, 128>}, {pipeline_mode = #tpu.pipeline_mode<synchronous>, transform_indices = @transform_9, window_bounds = array<i64: 32, 128>}, {pipeline_mode = #tpu.pipeline_mode<synchronous>, transform_indices = @transform_10, window_bounds = array<i64: 32, 128>}]} {
    %c0_i32 = arith.constant 0 : i32
    %0 = arith.cmpi eq, %arg0, %c0_i32 : i32
    %1 = arith.extui %0 : i1 to i32
    %c0_i32_0 = arith.constant 0 : i32
    %2 = arith.cmpi ne, %1, %c0_i32_0 : i32
    scf.if %2 {
      %cst_9 = arith.constant 0.000000e+00 : f32
      %14 = vector.broadcast %cst_9 : f32 to vector<32x128xf32>
      %c0_10 = arith.constant 0 : index
      %c0_11 = arith.constant 0 : index
      %15 = vector.load %arg12[%c0_10, %c0_11] : memref<32x128xf32, #tpu.memory_space<vmem>>, vector<32x128xf32>
      tpu.vector_store %arg12[%c0_10, %c0_11], %14 {strides = array<i32>} : memref<32x128xf32, #tpu.memory_space<vmem>>, vector<32x128xf32>,
    } else {
    }
    %c0 = arith.constant 0 : index
    %c0_1 = arith.constant 0 : index
    %3 = vector.load %arg12[%c0, %c0_1] : memref<32x128xf32, #tpu.memory_space<vmem>>, vector<32x128xf32>
    %c0_2 = arith.constant 0 : index
    %c0_3 = arith.constant 0 : index
    %4 = vector.load %arg1[%c0_2, %c0_3] : memref<32x128xf32, #tpu.memory_space<vmem>>, vector<32x128xf32>
    %5 = arith.truncf %4 : vector<32x128xf32> to vector<32x128xbf16>
    %c0_4 = arith.constant 0 : index
    %c0_5 = arith.constant 0 : index
    %6 = vector.load %arg2[%c0_4, %c0_5] : memref<128x128xf32, #tpu.memory_space<vmem>>, vector<128x128xf32>
    %7 = arith.truncf %6 : vector<128x128xf32> to vector<128x128xbf16>
    %cst = arith.constant dense<0.000000e+00> : vector<32x128xf32>
    %8 = tpu.matmul %5, %7, %cst {dimension_numbers = #tpu.dot_dimension_numbers<[1], [0], [0], [1], [0, 0, 1, 1], [], []>} : vector<32x128xbf16>, vector<128x128xbf16>, vector<32x128xf32> -> vector<32x128xf32>
    %9 = arith.addf %3, %8 : vector<32x128xf32>
    %c0_6 = arith.constant 0 : index
    %c0_7 = arith.constant 0 : index
    %10 = vector.load %arg12[%c0_6, %c0_7] : memref<32x128xf32, #tpu.memory_space<vmem>>, vector<32x128xf32>
    tpu.vector_store %arg12[%c0_6, %c0_7], %9 {strides = array<i32>} : memref<32x128xf32, #tpu.memory_space<vmem>>, vector<32x128xf32>,
    %c1_i32 = arith.constant 1 : i32
    %11 = arith.cmpi eq, %arg0, %c1_i32 : i32
    %12 = arith.extui %11 : i1 to i32
    %c0_i32_8 = arith.constant 0 : i32
    %13 = arith.cmpi ne, %12, %c0_i32_8 : i32
    scf.if %13 {
      %c0_9 = arith.constant 0 : index
      %c0_10 = arith.constant 0 : index
      %14 = vector.load %arg12[%c0_9, %c0_10] : memref<32x128xf32, #tpu.memory_space<vmem>>, vector<32x128xf32>
      %c0_11 = arith.constant 0 : index
      %c0_12 = arith.constant 0 : index
      %15 = vector.load %arg3[%c0_11, %c0_12] : memref<32x1xf32, #tpu.memory_space<vmem>>, vector<32x1xf32>
      %16 = vector.broadcast %15 : vector<32x1xf32> to vector<32x128xf32>
      %17 = arith.addf %14, %16 : vector<32x128xf32>
      %c0_13 = arith.constant 0 : index
      %c0_14 = arith.constant 0 : index
      %18 = vector.load %arg4[%c0_13, %c0_14] : memref<1x128xf32, #tpu.memory_space<vmem>>, vector<1x128xf32>
      %c0_15 = arith.constant 0 : index
      %c0_16 = arith.constant 0 : index
      %19 = vector.load %arg5[%c0_15, %c0_16] : memref<1x128xf32, #tpu.memory_space<vmem>>, vector<1x128xf32>
      %cst_17 = arith.constant dense<0.000000e+00> : vector<32xf32>
      %20 = vector.multi_reduction <add>, %17, %cst_17 [1] : vector<32x128xf32> to vector<32xf32>
      %21 = vector.shape_cast %20 : vector<32xf32> to vector<32x1xf32>
      %cst_18 = arith.constant 1.280000e+02 : f32
      %22 = vector.broadcast %cst_18 : f32 to vector<32x1xf32>
      %23 = arith.divf %21, %22 : vector<32x1xf32>
      %24 = vector.broadcast %23 : vector<32x1xf32> to vector<32x128xf32>
      %25 = arith.subf %17, %24 : vector<32x128xf32>
      %26 = arith.mulf %25, %25 : vector<32x128xf32>
      %cst_19 = arith.constant dense<0.000000e+00> : vector<32xf32>
      %27 = vector.multi_reduction <add>, %26, %cst_19 [1] : vector<32x128xf32> to vector<32xf32>
      %28 = vector.shape_cast %27 : vector<32xf32> to vector<32x1xf32>
      %cst_20 = arith.constant 1.280000e+02 : f32
      %29 = vector.broadcast %cst_20 : f32 to vector<32x1xf32>
      %30 = arith.divf %28, %29 : vector<32x1xf32>
      %cst_21 = arith.constant 9.99999974E-6 : f32
      %31 = vector.broadcast %cst_21 : f32 to vector<32x1xf32>
      %32 = arith.addf %30, %31 : vector<32x1xf32>
      %33 = math.rsqrt %32 : vector<32x1xf32>
      %34 = vector.broadcast %33 : vector<32x1xf32> to vector<32x128xf32>
      %35 = arith.mulf %25, %34 : vector<32x128xf32>
      %36 = vector.broadcast %18 : vector<1x128xf32> to vector<32x128xf32>
      %37 = arith.mulf %35, %36 : vector<32x128xf32>
      %38 = vector.broadcast %19 : vector<1x128xf32> to vector<32x128xf32>
      %39 = arith.addf %37, %38 : vector<32x128xf32>
      %c0_22 = arith.constant 0 : index
      %c0_23 = arith.constant 0 : index
      %40 = vector.load %arg6[%c0_22, %c0_23] : memref<128x128xbf16, #tpu.memory_space<vmem>>, vector<128x128xbf16>
      %41 = arith.truncf %39 : vector<32x128xf32> to vector<32x128xbf16>
      %cst_24 = arith.constant dense<0.000000e+00> : vector<32x128xf32>
      %42 = tpu.matmul %41, %40, %cst_24 {dimension_numbers = #tpu.dot_dimension_numbers<[1], [0], [0], [1], [0, 0, 1, 1], [], []>} : vector<32x128xbf16>, vector<128x128xbf16>, vector<32x128xf32> -> vector<32x128xf32>
      %c0_25 = arith.constant 0 : index
      %c0_26 = arith.constant 0 : index
      %43 = vector.load %arg7[%c0_25, %c0_26] : memref<1x128xf32, #tpu.memory_space<vmem>>, vector<1x128xf32>
      %44 = vector.broadcast %43 : vector<1x128xf32> to vector<32x128xf32>
      %45 = arith.addf %42, %44 : vector<32x128xf32>
      %46 = arith.truncf %45 : vector<32x128xf32> to vector<32x128xbf16>
      %c0_27 = arith.constant 0 : index
      %c0_28 = arith.constant 0 : index
      %47 = vector.load %arg10[%c0_27, %c0_28] : memref<32x128xbf16, #tpu.memory_space<vmem>>, vector<32x128xbf16>
      tpu.vector_store %arg10[%c0_27, %c0_28], %46 {strides = array<i32>} : memref<32x128xbf16, #tpu.memory_space<vmem>>, vector<32x128xbf16>,
      %c0_29 = arith.constant 0 : index
      %c0_30 = arith.constant 0 : index
      %48 = vector.load %arg8[%c0_29, %c0_30] : memref<128x128xbf16, #tpu.memory_space<vmem>>, vector<128x128xbf16>
      %49 = arith.truncf %39 : vector<32x128xf32> to vector<32x128xbf16>
      %cst_31 = arith.constant dense<0.000000e+00> : vector<32x128xf32>
      %50 = tpu.matmul %49, %48, %cst_31 {dimension_numbers = #tpu.dot_dimension_numbers<[1], [0], [0], [1], [0, 0, 1, 1], [], []>} : vector<32x128xbf16>, vector<128x128xbf16>, vector<32x128xf32> -> vector<32x128xf32>
      %c0_32 = arith.constant 0 : index
      %c0_33 = arith.constant 0 : index
      %51 = vector.load %arg9[%c0_32, %c0_33] : memref<1x128xf32, #tpu.memory_space<vmem>>, vector<1x128xf32>
      %52 = vector.broadcast %51 : vector<1x128xf32> to vector<32x128xf32>
      %53 = arith.addf %50, %52 : vector<32x128xf32>
      %54 = arith.truncf %53 : vector<32x128xf32> to vector<32x128xbf16>
      %c0_34 = arith.constant 0 : index
      %c0_35 = arith.constant 0 : index
      %55 = vector.load %arg11[%c0_34, %c0_35] : memref<32x128xbf16, #tpu.memory_space<vmem>>, vector<32x128xbf16>
      tpu.vector_store %arg11[%c0_34, %c0_35], %54 {strides = array<i32>} : memref<32x128xbf16, #tpu.memory_space<vmem>>, vector<32x128xbf16>,
    } else {
    }
    return
  }
  func.func @transform_0(%arg0: i32) -> (i32, i32) {
    %c0_i32 = arith.constant 0 : i32
    %c0_i32_0 = arith.constant 0 : i32
    return %c0_i32, %arg0 : i32, i32
  }
  func.func @transform_1(%arg0: i32) -> (i32, i32) {
    %c0_i32 = arith.constant 0 : i32
    %c0_i32_0 = arith.constant 0 : i32
    return %arg0, %c0_i32 : i32, i32
  }
  func.func @transform_2(%arg0: i32) -> (i32, i32) {
    %c0_i32 = arith.constant 0 : i32
    %c0_i32_0 = arith.constant 0 : i32
    %c0_i32_1 = arith.constant 0 : i32
    return %c0_i32, %c0_i32_0 : i32, i32
  }
  func.func @transform_3(%arg0: i32) -> (i32, i32) {
    %c0_i32 = arith.constant 0 : i32
    %c0_i32_0 = arith.constant 0 : i32
    %c0_i32_1 = arith.constant 0 : i32
    return %c0_i32, %c0_i32_0 : i32, i32
  }
  func.func @transform_4(%arg0: i32) -> (i32, i32) {
    %c0_i32 = arith.constant 0 : i32
    %c0_i32_0 = arith.constant 0 : i32
    %c0_i32_1 = arith.constant 0 : i32
    return %c0_i32, %c0_i32_0 : i32, i32
  }
  func.func @transform_5(%arg0: i32) -> (i32, i32) {
    %c0_i32 = arith.constant 0 : i32
    %c0_i32_0 = arith.constant 0 : i32
    %c0_i32_1 = arith.constant 0 : i32
    return %c0_i32, %c0_i32_0 : i32, i32
  }
  func.func @transform_6(%arg0: i32) -> (i32, i32) {
    %c0_i32 = arith.constant 0 : i32
    %c0_i32_0 = arith.constant 0 : i32
    %c0_i32_1 = arith.constant 0 : i32
    return %c0_i32, %c0_i32_0 : i32, i32
  }
  func.func @transform_7(%arg0: i32) -> (i32, i32) {
    %c0_i32 = arith.constant 0 : i32
    %c0_i32_0 = arith.constant 0 : i32
    %c0_i32_1 = arith.constant 0 : i32
    return %c0_i32, %c0_i32_0 : i32, i32
  }
  func.func @transform_8(%arg0: i32) -> (i32, i32) {
    %c0_i32 = arith.constant 0 : i32
    %c0_i32_0 = arith.constant 0 : i32
    %c0_i32_1 = arith.constant 0 : i32
    return %c0_i32, %c0_i32_0 : i32, i32
  }
  func.func @transform_9(%arg0: i32) -> (i32, i32) {
    %c0_i32 = arith.constant 0 : i32
    %c0_i32_0 = arith.constant 0 : i32
    %c0_i32_1 = arith.constant 0 : i32
    return %c0_i32, %c0_i32_0 : i32, i32
  }
  func.func @transform_10(%arg0: i32) -> (i32, i32) {
    %c0_i32 = arith.constant 0 : i32
    %c0_i32_0 = arith.constant 0 : i32
    %c0_i32_1 = arith.constant 0 : i32
    return %c0_i32, %c0_i32_0 : i32, i32
  }
}

</mosaic_0001>

<llo_original>
// kernel: tpu_custom_call.1
$region0: #{tpu_custom_call.1}
  #allocation0 [shape = 'u32[]', space=smem, size = 0x4, offset = 0x4, fixed_abs, tag = 'smem constant byte address 0x4 - core index']
  #allocation1 [shape = 'u32[144,128]{1,0:T(1,128)}', space=vmem, size = 0x12000, scoped, tag = 'internal scratch']
  #allocation2 [shape = 'f32[32,128]{1,0:T(8,128)}', space=vmem, size = 0x4000, scoped, tag = 'scratch operand']
  %s0 = inlined_call_operand.hbm [shape: f32[32,256], index: 0, kind: input, shape index: {}]
  %s1 = inlined_call_operand.hbm [shape: f32[256,128], index: 1, kind: input, shape index: {}]
  %s2 = inlined_call_operand.vmem [shape: f32[32,1], index: 2, kind: input, shape index: {}]
  %s3 = inlined_call_operand.vmem [shape: f32[1,128], index: 3, kind: input, shape index: {}]
  %s4 = inlined_call_operand.vmem [shape: f32[1,128], index: 4, kind: input, shape index: {}]
  %s5 = inlined_call_operand.hbm [shape: bf16[128,128], index: 5, kind: input, shape index: {}]
  %s6 = inlined_call_operand.vmem [shape: f32[1,128], index: 6, kind: input, shape index: {}]
  %s7 = inlined_call_operand.hbm [shape: bf16[128,128], index: 7, kind: input, shape index: {}]
  %s8 = inlined_call_operand.vmem [shape: f32[1,128], index: 8, kind: input, shape index: {}]
  %s9 = inlined_call_operand.hbm [shape: bf16[32,128], index: 9, kind: output, shape index: {0}]
  %s10 = inlined_call_operand.hbm [shape: bf16[32,128], index: 10, kind: output, shape index: {1}]
  %11 = xla_tuple %s9, %s10
  %s12 = sld [smem:[#allocation0]]
  $region101: #{tpu_custom_call.1} parent=0
    _
  %s14 = ssub.s32 1, %s12
  %s15 = scalar_select 0, %s14, %s12
  $region1: #{tpu_custom_call.1} parent=0
    #allocation3 [shape = 'u8[32768]{0}', space=vmem, size = 0x8000, scoped, tag = 'input window, operand 0']
    #allocation4 [shape = 's32[2]{0}', space=sflag, size = 0x8, scoped, tag = 'scoped memory for tpu_custom_call.1']
    #allocation5 [shape = 's32[2]{0}', space=sflag, size = 0x8, scoped, tag = 'scoped memory for tpu_custom_call.1']
    #allocation6 [shape = 'u8[131072]{0}', space=vmem, size = 0x20000, scoped, tag = 'input window, operand 1']
    #allocation7 [shape = 's32[2]{0}', space=sflag, size = 0x8, scoped, tag = 'scoped memory for tpu_custom_call.1']
    #allocation8 [shape = 'u8[32768]{0}', space=vmem, size = 0x8000, scoped, tag = 'input window, operand 5, single buffered']
    #allocation9 [shape = 'u8[32768]{0}', space=vmem, size = 0x8000, scoped, tag = 'input window, operand 7, single buffered']
    #allocation10 [shape = 's32[1]{0}', space=sflag, size = 0x4, scoped, tag = 'scoped memory for tpu_custom_call.1']
    #allocation11 [shape = 'u8[8192]{0}', space=vmem, size = 0x2000, scoped, tag = 'output window, operand 0, single buffered']
    #allocation12 [shape = 'u8[8192]{0}', space=vmem, size = 0x2000, scoped, tag = 'output window, operand 1, single buffered']
    #allocation13 [shape = 's32[1]{0}', space=sflag, size = 0x4, scoped, tag = 'scoped memory for tpu_custom_call.1']
    %16 = vsyncpa [#allocation4], 0
    %s17 = scalar_lea.sflag [#allocation4], 1
    %18 = vsyncpa %s17, 0
    %19 = vsyncpa [#allocation7], 0
    %s20 = scalar_lea.sflag [#allocation7], 1
    %21 = vsyncpa %s20, 0
    %22 = vsyncpa [#allocation10], 0
    %23 = vsyncpa [#allocation5], 0
    %24 = vsyncpa [#allocation13], 0
    loop: start=0, step=1, limit=4
    $region2: #{tpu_custom_call.1} parent=1 // loop_pre_header
      _
    $region3: #{tpu_custom_call.1} parent=1 // loop_header
      %s26 = sphi 0, %s30
      %p27 = scmp.ge.s32.totalorder %s26, 4
      %s36 = sphi 0, %s38
      %s39 = sphi 0, %s36
      %s40 = sphi 0, %s39
      %s56 = sphi 0, %s40
      %s62 = sphi 0, %s64
      %s65 = sphi 0, %s62
      %s66 = sphi 0, %s65
      %s82 = sphi 0, %s66
      %s86 = sphi 0, %s86
      %s88 = sphi 0, %s86
      %s89 = sphi 0, %s88
      %s103 = sphi 0, %s89
      %s107 = sphi 0, %s107
      %s109 = sphi 0, %s107
      %s110 = sphi 0, %s109
      %s124 = sphi 0, %s110
      %s128 = sphi 0, %s128
      %s130 = sphi 0, %s128
      %s131 = sphi 0, %s130
      %s145 = sphi 0, %s131
      %s149 = sphi 0, %s149
      %s151 = sphi 0, %s149
      %s152 = sphi 0, %s151
      %s166 = sphi 0, %s152
      %s170 = sphi 0, %s170
      %s172 = sphi 0, %s170
      %s173 = sphi 0, %s172
      %s187 = sphi 0, %s173
      %s191 = sphi 0, %s191
      %s193 = sphi 0, %s191
      %s194 = sphi 0, %s193
      %s208 = sphi 0, %s194
      %s212 = sphi 0, %s212
      %s214 = sphi 0, %s212
      %s215 = sphi 0, %s214
      %s229 = sphi 0, %s215
      %s233 = sphi 0, %s233
      %s235 = sphi 0, %s233
      %s236 = sphi 0, %s235
      %s250 = sphi 0, %s236
      %s254 = sphi 0, %s254
      %s256 = sphi 0, %s254
      %s257 = sphi 0, %s256
      %s271 = sphi 0, %s257
    $region4: #{tpu_custom_call.1} parent=1 // loop_header_branch
      %29 = sbr.rel (%p27) target = $region8
    $region5: #{tpu_custom_call.1} parent=1 // loop_body
      %s31 = ssub.s32 %s26, 1
      %s32 = ssub.s32 %s26, 2
      %s33 = sadd.s32 %s26, 1
      %s34 = ssub.s32 %s26, %s33
      %p35 = scmp.eq.s32.totalorder %s34, 0
      %s37 = sadd.s32 %s36, 1
      %s38 = scalar_select %p35, %s36, %s37
      %p41 = pneg %p35
      %p42 = scmp.eq.s32.totalorder %s26, 1
      %p43 = por %p41, %p42
      %p44 = scmp.ne.s32.totalorder %s36, %s39
      %p45 = scmp.eq.s32.totalorder %s26, 0
      %p46 = por %p44, %p45
      %p47 = scmp.ne.s32.totalorder %s36, %s39
      %p48 = scmp.eq.s32.totalorder %s31, 1
      %p49 = por %p47, %p48
      %p50 = scmp.ne.s32.totalorder %s39, %s40
      %p51 = scmp.eq.s32.totalorder %s31, 0
      %p52 = por %p50, %p51
      %p53 = scmp.ne.s32.totalorder %s39, %s40
      %p54 = scmp.eq.s32.totalorder %s32, 1
      %p55 = por %p53, %p54
      %p57 = scmp.ne.s32.totalorder %s40, %s56
      %p58 = scmp.eq.s32.totalorder %s32, 0
      %p59 = por %p57, %p58
      %s60 = ssub.s32 %s26, %s33
      %p61 = scmp.eq.s32.totalorder %s60, 0
      %s63 = sadd.s32 %s62, 1
      %s64 = scalar_select %p61, %s62, %s63
      %p67 = pneg %p61
      %p68 = scmp.eq.s32.totalorder %s26, 1
      %p69 = por %p67, %p68
      %p70 = scmp.ne.s32.totalorder %s62, %s65
      %p71 = scmp.eq.s32.totalorder %s26, 0
      %p72 = por %p70, %p71
      %p73 = scmp.ne.s32.totalorder %s62, %s65
      %p74 = scmp.eq.s32.totalorder %s31, 1
      %p75 = por %p73, %p74
      %p76 = scmp.ne.s32.totalorder %s65, %s66
      %p77 = scmp.eq.s32.totalorder %s31, 0
      %p78 = por %p76, %p77
      %p79 = scmp.ne.s32.totalorder %s65, %s66
      %p80 = scmp.eq.s32.totalorder %s32, 1
      %p81 = por %p79, %p80
      %p83 = scmp.ne.s32.totalorder %s66, %s82
      %p84 = scmp.eq.s32.totalorder %s32, 0
      %p85 = por %p83, %p84
      %s87 = sadd.s32 %s86, 1
      %p90 = scmp.eq.s32.totalorder %s26, 1
      %p91 = scmp.ne.s32.totalorder %s86, %s88
      %p92 = scmp.eq.s32.totalorder %s26, 0
      %p93 = por %p91, %p92
      %p94 = scmp.ne.s32.totalorder %s86, %s88
      %p95 = scmp.eq.s32.totalorder %s31, 1
      %p96 = por %p94, %p95
      %p97 = scmp.ne.s32.totalorder %s88, %s89
      %p98 = scmp.eq.s32.totalorder %s31, 0
      %p99 = por %p97, %p98
      %p100 = scmp.ne.s32.totalorder %s88, %s89
      %p101 = scmp.eq.s32.totalorder %s32, 1
      %p102 = por %p100, %p101
      %p104 = scmp.ne.s32.totalorder %s89, %s103
      %p105 = scmp.eq.s32.totalorder %s32, 0
      %p106 = por %p104, %p105
      %s108 = sadd.s32 %s107, 1
      %p111 = scmp.eq.s32.totalorder %s26, 1
      %p112 = scmp.ne.s32.totalorder %s107, %s109
      %p113 = scmp.eq.s32.totalorder %s26, 0
      %p114 = por %p112, %p113
      %p115 = scmp.ne.s32.totalorder %s107, %s109
      %p116 = scmp.eq.s32.totalorder %s31, 1
      %p117 = por %p115, %p116
      %p118 = scmp.ne.s32.totalorder %s109, %s110
      %p119 = scmp.eq.s32.totalorder %s31, 0
      %p120 = por %p118, %p119
      %p121 = scmp.ne.s32.totalorder %s109, %s110
      %p122 = scmp.eq.s32.totalorder %s32, 1
      %p123 = por %p121, %p122
      %p125 = scmp.ne.s32.totalorder %s110, %s124
      %p126 = scmp.eq.s32.totalorder %s32, 0
      %p127 = por %p125, %p126
      %s129 = sadd.s32 %s128, 1
      %p132 = scmp.eq.s32.totalorder %s26, 1
      %p133 = scmp.ne.s32.totalorder %s128, %s130
      %p134 = scmp.eq.s32.totalorder %s26, 0
      %p135 = por %p133, %p134
      %p136 = scmp.ne.s32.totalorder %s128, %s130
      %p137 = scmp.eq.s32.totalorder %s31, 1
      %p138 = por %p136, %p137
      %p139 = scmp.ne.s32.totalorder %s130, %s131
      %p140 = scmp.eq.s32.totalorder %s31, 0
      %p141 = por %p139, %p140
      %p142 = scmp.ne.s32.totalorder %s130, %s131
      %p143 = scmp.eq.s32.totalorder %s32, 1
      %p144 = por %p142, %p143
      %p146 = scmp.ne.s32.totalorder %s131, %s145
      %p147 = scmp.eq.s32.totalorder %s32, 0
      %p148 = por %p146, %p147
      %s150 = sadd.s32 %s149, 1
      %p153 = scmp.eq.s32.totalorder %s26, 1
      %p154 = scmp.ne.s32.totalorder %s149, %s151
      %p155 = scmp.eq.s32.totalorder %s26, 0
      %p156 = por %p154, %p155
      %p157 = scmp.ne.s32.totalorder %s149, %s151
      %p158 = scmp.eq.s32.totalorder %s31, 1
      %p159 = por %p157, %p158
      %p160 = scmp.ne.s32.totalorder %s151, %s152
      %p161 = scmp.eq.s32.totalorder %s31, 0
      %p162 = por %p160, %p161
      %p163 = scmp.ne.s32.totalorder %s151, %s152
      %p164 = scmp.eq.s32.totalorder %s32, 1
      %p165 = por %p163, %p164
      %p167 = scmp.ne.s32.totalorder %s152, %s166
      %p168 = scmp.eq.s32.totalorder %s32, 0
      %p169 = por %p167, %p168
      %s171 = sadd.s32 %s170, 1
      %p174 = scmp.eq.s32.totalorder %s26, 1
      %p175 = scmp.ne.s32.totalorder %s170, %s172
      %p176 = scmp.eq.s32.totalorder %s26, 0
      %p177 = por %p175, %p176
      %p178 = scmp.ne.s32.totalorder %s170, %s172
      %p179 = scmp.eq.s32.totalorder %s31, 1
      %p180 = por %p178, %p179
      %p181 = scmp.ne.s32.totalorder %s172, %s173
      %p182 = scmp.eq.s32.totalorder %s31, 0
      %p183 = por %p181, %p182
      %p184 = scmp.ne.s32.totalorder %s172, %s173
      %p185 = scmp.eq.s32.totalorder %s32, 1
      %p186 = por %p184, %p185
      %p188 = scmp.ne.s32.totalorder %s173, %s187
      %p189 = scmp.eq.s32.totalorder %s32, 0
      %p190 = por %p188, %p189
      %s192 = sadd.s32 %s191, 1
      %p195 = scmp.eq.s32.totalorder %s26, 1
      %p196 = scmp.ne.s32.totalorder %s191, %s193
      %p197 = scmp.eq.s32.totalorder %s26, 0
      %p198 = por %p196, %p197
      %p199 = scmp.ne.s32.totalorder %s191, %s193
      %p200 = scmp.eq.s32.totalorder %s31, 1
      %p201 = por %p199, %p200
      %p202 = scmp.ne.s32.totalorder %s193, %s194
      %p203 = scmp.eq.s32.totalorder %s31, 0
      %p204 = por %p202, %p203
      %p205 = scmp.ne.s32.totalorder %s193, %s194
      %p206 = scmp.eq.s32.totalorder %s32, 1
      %p207 = por %p205, %p206
      %p209 = scmp.ne.s32.totalorder %s194, %s208
      %p210 = scmp.eq.s32.totalorder %s32, 0
      %p211 = por %p209, %p210
      %s213 = sadd.s32 %s212, 1
      %p216 = scmp.eq.s32.totalorder %s26, 1
      %p217 = scmp.ne.s32.totalorder %s212, %s214
      %p218 = scmp.eq.s32.totalorder %s26, 0
      %p219 = por %p217, %p218
      %p220 = scmp.ne.s32.totalorder %s212, %s214
      %p221 = scmp.eq.s32.totalorder %s31, 1
      %p222 = por %p220, %p221
      %p223 = scmp.ne.s32.totalorder %s214, %s215
      %p224 = scmp.eq.s32.totalorder %s31, 0
      %p225 = por %p223, %p224
      %p226 = scmp.ne.s32.totalorder %s214, %s215
      %p227 = scmp.eq.s32.totalorder %s32, 1
      %p228 = por %p226, %p227
      %p230 = scmp.ne.s32.totalorder %s215, %s229
      %p231 = scmp.eq.s32.totalorder %s32, 0
      %p232 = por %p230, %p231
      %s234 = sadd.s32 %s233, 1
      %p237 = scmp.eq.s32.totalorder %s26, 1
      %p238 = scmp.ne.s32.totalorder %s233, %s235
      %p239 = scmp.eq.s32.totalorder %s26, 0
      %p240 = por %p238, %p239
      %p241 = scmp.ne.s32.totalorder %s233, %s235
      %p242 = scmp.eq.s32.totalorder %s31, 1
      %p243 = por %p241, %p242
      %p244 = scmp.ne.s32.totalorder %s235, %s236
      %p245 = scmp.eq.s32.totalorder %s31, 0
      %p246 = por %p244, %p245
      %p247 = scmp.ne.s32.totalorder %s235, %s236
      %p248 = scmp.eq.s32.totalorder %s32, 1
      %p249 = por %p247, %p248
      %p251 = scmp.ne.s32.totalorder %s236, %s250
      %p252 = scmp.eq.s32.totalorder %s32, 0
      %p253 = por %p251, %p252
      %s255 = sadd.s32 %s254, 1
      %p258 = scmp.eq.s32.totalorder %s26, 1
      %p259 = scmp.ne.s32.totalorder %s254, %s256
      %p260 = scmp.eq.s32.totalorder %s26, 0
      %p261 = por %p259, %p260
      %p262 = scmp.ne.s32.totalorder %s254, %s256
      %p263 = scmp.eq.s32.totalorder %s31, 1
      %p264 = por %p262, %p263
      %p265 = scmp.ne.s32.totalorder %s256, %s257
      %p266 = scmp.eq.s32.totalorder %s31, 0
      %p267 = por %p265, %p266
      %p268 = scmp.ne.s32.totalorder %s256, %s257
      %p269 = scmp.eq.s32.totalorder %s32, 1
      %p270 = por %p268, %p269
      %p272 = scmp.ne.s32.totalorder %s257, %s271
      %p273 = scmp.eq.s32.totalorder %s32, 0
      %p274 = por %p272, %p273
      %p275 = scmp.le.s32.totalorder 1, %s26
      %p276 = scmp.lt.s32.totalorder %s26, 3
      %p277 = pnand %p275, %p276
      %p278 = pneg %p277
      // Predicated region
      $region9: #{tpu_custom_call.1} parent=5 // pred_check
        _
      $region10: #{tpu_custom_call.1} parent=5 // pred_check_branch
        %280 = sbr.rel (%p277) target = $region12
      $region11: #{tpu_custom_call.1} parent=5 // pred_region
        %s281 = ssub.s32 %s26, 1
        // Predicated region
        $region13: #{tpu_custom_call.1} parent=11 // pred_check
          %p282 = pneg %p99
        $region14: #{tpu_custom_call.1} parent=11 // pred_check_branch
          %284 = sbr.rel (%p282) target = $region16
        $region15: #{tpu_custom_call.1} parent=11 // pred_region
          _
        $region16: #{tpu_custom_call.1} parent=11 // pred_fallthru
          _
        // Predicated region
        $region17: #{tpu_custom_call.1} parent=11 // pred_check
          %p285 = pneg %p120
        $region18: #{tpu_custom_call.1} parent=11 // pred_check_branch
          %287 = sbr.rel (%p285) target = $region20
        $region19: #{tpu_custom_call.1} parent=11 // pred_region
          _
        $region20: #{tpu_custom_call.1} parent=11 // pred_fallthru
          _
        // Predicated region
        $region21: #{tpu_custom_call.1} parent=11 // pred_check
          %p288 = pneg %p141
        $region22: #{tpu_custom_call.1} parent=11 // pred_check_branch
          %290 = sbr.rel (%p288) target = $region24
        $region23: #{tpu_custom_call.1} parent=11 // pred_region
          _
        $region24: #{tpu_custom_call.1} parent=11 // pred_fallthru
          _
        // Predicated region
        $region25: #{tpu_custom_call.1} parent=11 // pred_check
          %p291 = pneg %p162
        $region26: #{tpu_custom_call.1} parent=11 // pred_check_branch
          %293 = sbr.rel (%p291) target = $region28
        $region27: #{tpu_custom_call.1} parent=11 // pred_region
          %s295 = ssub.s32 1024, 1024
          %296 = vsyncadd [#allocation7], %s295
          %s297 = sshll.u32 [#allocation8], 4
          %s298 = int_to_ptr.vmem [resolvable:$true] %s297
          %303 = dma.hbm_to_vmem [thread:$0]  %s5, 1024, %s298, [#allocation7], 64, 64, 4
        $region28: #{tpu_custom_call.1} parent=11 // pred_fallthru
          _
        // Predicated region
        $region29: #{tpu_custom_call.1} parent=11 // pred_check
          %p304 = pneg %p183
        $region30: #{tpu_custom_call.1} parent=11 // pred_check_branch
          %306 = sbr.rel (%p304) target = $region32
        $region31: #{tpu_custom_call.1} parent=11 // pred_region
          _
        $region32: #{tpu_custom_call.1} parent=11 // pred_fallthru
          _
        // Predicated region
        $region33: #{tpu_custom_call.1} parent=11 // pred_check
          %p307 = pneg %p204
        $region34: #{tpu_custom_call.1} parent=11 // pred_check_branch
          %309 = sbr.rel (%p307) target = $region36
        $region35: #{tpu_custom_call.1} parent=11 // pred_region
          %s311 = ssub.s32 1024, 1024
          %312 = vsyncadd [#allocation10], %s311
          %s313 = sshll.u32 [#allocation9], 4
          %s314 = int_to_ptr.vmem [resolvable:$true] %s313
          %319 = dma.hbm_to_vmem [thread:$0]  %s7, 1024, %s314, [#allocation10], 64, 64, 4
        $region36: #{tpu_custom_call.1} parent=11 // pred_fallthru
          _
        // Predicated region
        $region37: #{tpu_custom_call.1} parent=11 // pred_check
          %p320 = pneg %p225
        $region38: #{tpu_custom_call.1} parent=11 // pred_check_branch
          %322 = sbr.rel (%p320) target = $region40
        $region39: #{tpu_custom_call.1} parent=11 // pred_region
          _
        $region40: #{tpu_custom_call.1} parent=11 // pred_fallthru
          _
      $region12: #{tpu_custom_call.1} parent=5 // pred_fallthru
        _
      %p323 = scmp.lt.s32.totalorder %s26, 2
      // Predicated region
      $region41: #{tpu_custom_call.1} parent=5 // pred_check
        %p324 = pneg %p323
      $region42: #{tpu_custom_call.1} parent=5 // pred_check_branch
        %326 = sbr.rel (%p324) target = $region44
      $region43: #{tpu_custom_call.1} parent=5 // pred_region
        // Predicated region
        $region45: #{tpu_custom_call.1} parent=43 // pred_check
          %p327 = pneg %p46
        $region46: #{tpu_custom_call.1} parent=43 // pred_check_branch
          %329 = sbr.rel (%p327) target = $region48
        $region47: #{tpu_custom_call.1} parent=43 // pred_region
          %s330 = sand.u32 %s36, 1
          %s331 = scalar_lea.sflag [#allocation4], %s330
          %s332 = sand.u32 %s36, 1
          %s333 = smul.addr %s332, 32
          %s334 = scalar_lea.vmem [#allocation3], %s333
          %s336 = ssub.s32 512, 512
          %337 = vsyncadd %s331, %s336
          %s338 = smul.addr %s26, 128
          %s339 = scalar_lea.hbm %s0, %s338
          %s340 = sshll.u32 %s334, 4
          %s341 = int_to_ptr.vmem [resolvable:$true] %s340
          %346 = dma.hbm_to_vmem [thread:$0]  %s339, 512, %s341, %s331, 256, 128, 8
        $region48: #{tpu_custom_call.1} parent=43 // pred_fallthru
          _
        // Predicated region
        $region49: #{tpu_custom_call.1} parent=43 // pred_check
          %p347 = pneg %p72
        $region50: #{tpu_custom_call.1} parent=43 // pred_check_branch
          %349 = sbr.rel (%p347) target = $region52
        $region51: #{tpu_custom_call.1} parent=43 // pred_region
          %s350 = sand.u32 %s26, 1
          %s351 = scalar_lea.sflag [#allocation7], %s350
          %s352 = sand.u32 %s62, 1
          %s353 = smul.addr %s352, 128
          %s354 = scalar_lea.vmem [#allocation6], %s353
          %s355 = smul.u32 16, %s26
          %s357 = ssub.s32 2048, 2048
          %358 = vsyncadd %s351, %s357
          %s359 = smul.addr %s355, 128
          %s360 = scalar_lea.hbm %s1, %s359
          %s361 = sshll.u32 %s354, 4
          %s362 = int_to_ptr.vmem [resolvable:$true] %s361
          %367 = dma.hbm_to_vmem [thread:$0]  %s360, 2048, %s362, %s351, 128, 128, 8
        $region52: #{tpu_custom_call.1} parent=43 // pred_fallthru
          _
      $region44: #{tpu_custom_call.1} parent=5 // pred_fallthru
        _
      %p368 = scmp.le.s32.totalorder 1, %s26
      %p369 = scmp.lt.s32.totalorder %s26, 3
      %p370 = pnand %p368, %p369
      %p371 = pneg %p370
      // Predicated region
      $region53: #{tpu_custom_call.1} parent=5 // pred_check
        _
      $region54: #{tpu_custom_call.1} parent=5 // pred_check_branch
        %373 = sbr.rel (%p370) target = $region56
      $region55: #{tpu_custom_call.1} parent=5 // pred_region
        %s374 = ssub.s32 %s26, 1
        %s375 = sand.u32 %s39, 1
        %s376 = scalar_lea.sflag [#allocation4], %s375
        %s377 = sand.u32 %s39, 1
        %s378 = smul.addr %s377, 32
        %s379 = scalar_lea.vmem [#allocation3], %s378
        // Predicated region
        $region57: #{tpu_custom_call.1} parent=55 // pred_check
          %p380 = pneg %p52
        $region58: #{tpu_custom_call.1} parent=55 // pred_check_branch
          %382 = sbr.rel (%p380) target = $region60
        $region59: #{tpu_custom_call.1} parent=55 // pred_region
          %383 = dma.done %s376, 512
        $region60: #{tpu_custom_call.1} parent=55 // pred_fallthru
          _
        %s384 = sand.u32 %s31, 1
        %s385 = scalar_lea.sflag [#allocation7], %s384
        %s386 = sand.u32 %s65, 1
        %s387 = smul.addr %s386, 128
        %s388 = scalar_lea.vmem [#allocation6], %s387
        // Predicated region
        $region61: #{tpu_custom_call.1} parent=55 // pred_check
          %p389 = pneg %p78
        $region62: #{tpu_custom_call.1} parent=55 // pred_check_branch
          %391 = sbr.rel (%p389) target = $region64
        $region63: #{tpu_custom_call.1} parent=55 // pred_region
          %392 = dma.done %s385, 2048
        $region64: #{tpu_custom_call.1} parent=55 // pred_fallthru
          _
        // Predicated region
        $region65: #{tpu_custom_call.1} parent=55 // pred_check
          %p393 = pneg %p162
        $region66: #{tpu_custom_call.1} parent=55 // pred_check_branch
          %395 = sbr.rel (%p393) target = $region68
        $region67: #{tpu_custom_call.1} parent=55 // pred_region
          %396 = dma.done [#allocation7], 1024
        $region68: #{tpu_custom_call.1} parent=55 // pred_fallthru
          _
        // Predicated region
        $region69: #{tpu_custom_call.1} parent=55 // pred_check
          %p397 = pneg %p204
        $region70: #{tpu_custom_call.1} parent=55 // pred_check_branch
          %399 = sbr.rel (%p397) target = $region72
        $region71: #{tpu_custom_call.1} parent=55 // pred_region
          %400 = dma.done [#allocation10], 1024
        $region72: #{tpu_custom_call.1} parent=55 // pred_fallthru
          _
        %s401 = sand.u32 %s39, 1
        %s402 = scalar_lea.sflag [#allocation4], %s401
        %s403 = sand.u32 %s39, 1
        %s404 = smul.addr %s403, 32
        %s405 = scalar_lea.vmem [#allocation3], %s404
        %p406 = pneg %p52
        %p407 = pneg %p49
        %s408 = sand.u32 %s31, 1
        %s409 = scalar_lea.sflag [#allocation7], %s408
        %s410 = sand.u32 %s65, 1
        %s411 = smul.addr %s410, 128
        %s412 = scalar_lea.vmem [#allocation6], %s411
        %p413 = pneg %p78
        %p414 = pneg %p75
        %p415 = pneg %p99
        %p416 = pneg %p96
        %p417 = pneg %p120
        %p418 = pneg %p117
        %p419 = pneg %p141
        %p420 = pneg %p138
        %p421 = pneg %p162
        %p422 = pneg %p159
        %p423 = pneg %p183
        %p424 = pneg %p180
        %p425 = pneg %p204
        %p426 = pneg %p201
        %p427 = pneg %p225
        %p428 = pneg %p222
        %p429 = pneg %p246
        %p430 = pneg %p243
        %p431 = pneg %p267
        %p432 = pneg %p264
        %s433 = smul.u32 16, %s31
        %p435 = scmp.eq.s32.totalorder %s31, 0
        // Predicated region
        $region73: #{tpu_custom_call.1} parent=55 // pred_check
          %p436 = pneg %p435
        $region74: #{tpu_custom_call.1} parent=55 // pred_check_branch
          %438 = sbr.rel (%p436) target = $region76
        $region75: #{tpu_custom_call.1} parent=55 // pred_region
          %439 = vst [vmem:[#allocation2] sm:$0xff] 0.0
          %440 = vst [vmem:[#allocation2 + $0x8] sm:$0xff] 0.0
          %441 = vst [vmem:[#allocation2 + $0x10] sm:$0xff] 0.0
          %442 = vst [vmem:[#allocation2 + $0x18] sm:$0xff] 0.0
        $region76: #{tpu_custom_call.1} parent=55 // pred_fallthru
          _
        %v443 = vld [vmem:[#allocation2] sm:$0xff]
        %v444 = vld [vmem:[#allocation2 + $0x8] sm:$0xff]
        %v445 = vld [vmem:[#allocation2 + $0x10] sm:$0xff]
        %v446 = vld [vmem:[#allocation2 + $0x18] sm:$0xff]
        %v447 = vld [vmem:[%s379] sm:$0xff]
        %v448 = vld [vmem:[%s379 + $0x8] sm:$0xff]
        %v449 = vld [vmem:[%s379 + $0x10] sm:$0xff]
        %v450 = vld [vmem:[%s379 + $0x18] sm:$0xff]
        %v451 = vpack.c.bf16 %v448, %v447
        %v452 = vpack.c.bf16 %v450, %v449
        %v453 = vld [vmem:[%s388] sm:$0xff]
        %v454 = vld [vmem:[%s388 + $0x8] sm:$0xff]
        %v455 = vld [vmem:[%s388 + $0x10] sm:$0xff]
        %v456 = vld [vmem:[%s388 + $0x18] sm:$0xff]
        %v457 = vld [vmem:[%s388 + $0x20] sm:$0xff]
        %v458 = vld [vmem:[%s388 + $0x28] sm:$0xff]
        %v459 = vld [vmem:[%s388 + $0x30] sm:$0xff]
        %v460 = vld [vmem:[%s388 + $0x38] sm:$0xff]
        %v461 = vld [vmem:[%s388 + $0x40] sm:$0xff]
        %v462 = vld [vmem:[%s388 + $0x48] sm:$0xff]
        %v463 = vld [vmem:[%s388 + $0x50] sm:$0xff]
        %v464 = vld [vmem:[%s388 + $0x58] sm:$0xff]
        %v465 = vld [vmem:[%s388 + $0x60] sm:$0xff]
        %v466 = vld [vmem:[%s388 + $0x68] sm:$0xff]
        %v467 = vld [vmem:[%s388 + $0x70] sm:$0xff]
        %v468 = vld [vmem:[%s388 + $0x78] sm:$0xff]
        %v469 = vpack.c.bf16 %v454, %v453
        %v470 = vpack.c.bf16 %v456, %v455
        %v471 = vpack.c.bf16 %v458, %v457
        %v472 = vpack.c.bf16 %v460, %v459
        %v473 = vpack.c.bf16 %v462, %v461
        %v474 = vpack.c.bf16 %v464, %v463
        %v475 = vpack.c.bf16 %v466, %v465
        %v476 = vpack.c.bf16 %v468, %v467
        %477 = vmatprep.subr.bf16.mxu0 0
        %478 = vmatpush1.bf16.msra.mxu0 %v469
        %479 = vmatprep.subr.bf16.mxu0 0
        %480 = vmatpush1.bf16.msra.mxu0 %v470
        %481 = vmatprep.subr.bf16.mxu0 0
        %482 = vmatpush1.bf16.msra.mxu0 %v471
        %483 = vmatprep.subr.bf16.mxu0 0
        %484 = vmatpush1.bf16.msra.mxu0 %v472
        %485 = vmatprep.subr.bf16.mxu0 0
        %486 = vmatpush1.bf16.msra.mxu0 %v473
        %487 = vmatprep.subr.bf16.mxu0 0
        %488 = vmatpush1.bf16.msra.mxu0 %v474
        %489 = vmatprep.subr.bf16.mxu0 0
        %490 = vmatpush1.bf16.msra.mxu0 %v475
        %491 = vmatprep.subr.bf16.mxu0 0
        %492 = vmatpush1.bf16.msra.mxu0 %v476
        %493 = vmatprep.subr.bf16.mxu0 0
        %494 = vmatpush1.bf16.msra.mxu0 0
        %495 = vmatprep.subr.bf16.mxu0 0
        %496 = vmatpush1.bf16.msra.mxu0 0
        %497 = vmatprep.subr.bf16.mxu0 0
        %498 = vmatpush1.bf16.msra.mxu0 0
        %499 = vmatprep.subr.bf16.mxu0 0
        %500 = vmatpush1.bf16.msra.mxu0 0
        %501 = vmatprep.subr.bf16.mxu0 0
        %502 = vmatpush1.bf16.msra.mxu0 0
        %503 = vmatprep.subr.bf16.mxu0 0
        %504 = vmatpush1.bf16.msra.mxu0 0
        %505 = vmatprep.subr.bf16.mxu0 0
        %506 = vmatpush1.bf16.msra.mxu0 0
        %507 = vmatprep.subr.bf16.mxu0 0
        %508 = vmatpush1.bf16.msra.mxu0 0
        %509 = vmatprep.mubr.bf16.mxu0 0
        %510 = vmatmul.mubr.bf16.gmra.mrb[0].mxu0 %v451
        %v511 = vpop.f32.mrb[0].mxu0
        %v512 = vadd.f32 0.0, %v511
        %v513 = vpop.f32.mrb[0].mxu0
        %v514 = vpop.f32.mrb[0].mxu0
        %v515 = vadd.f32 0.0, %v514
        %v516 = vpop.f32.mrb[0].mxu0
        %517 = vmatprep.mubr.bf16.mxu0 0
        %518 = vmatmul.mubr.bf16.gmra.mrb[0].mxu0 %v452
        %v519 = vpop.f32.mrb[0].mxu0
        %v520 = vadd.f32 0.0, %v519
        %v521 = vpop.f32.mrb[0].mxu0
        %v522 = vpop.f32.mrb[0].mxu0
        %v523 = vadd.f32 0.0, %v522
        %v524 = vpop.f32.mrb[0].mxu0
        %525 = vdwg.mxu0
        %v526 = vadd.f32 %v443, %v512
        %v527 = vadd.f32 %v444, %v515
        %v528 = vadd.f32 %v445, %v520
        %v529 = vadd.f32 %v446, %v523
        %530 = vst [vmem:[#allocation2] sm:$0xff] %v526
        %531 = vst [vmem:[#allocation2 + $0x8] sm:$0xff] %v527
        %532 = vst [vmem:[#allocation2 + $0x10] sm:$0xff] %v528
        %533 = vst [vmem:[#allocation2 + $0x18] sm:$0xff] %v529
        %p534 = scmp.eq.s32.totalorder %s31, 1
        // Predicated region
        $region77: #{tpu_custom_call.1} parent=55 // pred_check
          %p535 = pneg %p534
        $region78: #{tpu_custom_call.1} parent=55 // pred_check_branch
          %537 = sbr.rel (%p535) target = $region80
        $region79: #{tpu_custom_call.1} parent=55 // pred_region
          %v538 = vld [vmem:[#allocation2] sm:$0xff]
          %v539 = vld [vmem:[#allocation2 + $0x8] sm:$0xff]
          %v540 = vld [vmem:[#allocation2 + $0x10] sm:$0xff]
          %v541 = vld [vmem:[#allocation2 + $0x18] sm:$0xff]
          %v542 = vld [vmem:[%s2] sm:$0xff]
          %v543 = vld [vmem:[%s2 + $0x8] sm:$0xff]
          %v544 = vld [vmem:[%s2 + $0x10] sm:$0xff]
          %v545 = vld [vmem:[%s2 + $0x18] sm:$0xff]
          %547 = vset.pattern.permute.xlu0 0
          %548 = vperm.xlu0 %547, %v542
          %v549 = vpop.permute.xlu0 %548
          %552 = vset.pattern.permute.xlu0 0
          %553 = vperm.xlu0 %552, %v543
          %v554 = vpop.permute.xlu0 %553
          %557 = vset.pattern.permute.xlu0 0
          %558 = vperm.xlu0 %557, %v544
          %v559 = vpop.permute.xlu0 %558
          %562 = vset.pattern.permute.xlu0 0
          %563 = vperm.xlu0 %562, %v545
          %v564 = vpop.permute.xlu0 %563
          %v566 = vadd.f32 %v538, %v549
          %v567 = vadd.f32 %v539, %v554
          %v568 = vadd.f32 %v540, %v559
          %v569 = vadd.f32 %v541, %v564
          %v570 = vld [vmem:[%s3] sm:$0x1]
          %v571 = vld [vmem:[%s4] sm:$0x1]
          %572 = vadd.xlane.f32.xlu0 %v566
          %v573 = vpop.xlane.xlu0 %572
          %574 = vadd.xlane.f32.xlu0 %v567
          %v575 = vpop.xlane.xlu0 %574
          %576 = vadd.xlane.f32.xlu0 %v568
          %v577 = vpop.xlane.xlu0 %576
          %578 = vadd.xlane.f32.xlu0 %v569
          %v579 = vpop.xlane.xlu0 %578
          %v580 = vrcp.pop 128.0
          %v581 = vmul.f32 %v573, %v580
          %v582 = vmul.f32 %v575, %v580
          %v583 = vmul.f32 %v577, %v580
          %v584 = vmul.f32 %v579, %v580
          %v585 = vsub.f32 %v566, %v581
          %v586 = vsub.f32 %v567, %v582
          %v587 = vsub.f32 %v568, %v583
          %v588 = vsub.f32 %v569, %v584
          %v589 = vmul.f32 %v585, %v585
          %v590 = vmul.f32 %v586, %v586
          %v591 = vmul.f32 %v587, %v587
          %v592 = vmul.f32 %v588, %v588
          %593 = vadd.xlane.f32.xlu0 %v589
          %v594 = vpop.xlane.xlu0 %593
          %595 = vadd.xlane.f32.xlu0 %v590
          %v596 = vpop.xlane.xlu0 %595
          %597 = vadd.xlane.f32.xlu0 %v591
          %v598 = vpop.xlane.xlu0 %597
          %599 = vadd.xlane.f32.xlu0 %v592
          %v600 = vpop.xlane.xlu0 %599
          %v601 = vmul.f32 %v594, %v580
          %v602 = vmul.f32 %v596, %v580
          %v603 = vmul.f32 %v598, %v580
          %v604 = vmul.f32 %v600, %v580
          %v605 = vadd.f32 %v601, 1e-05
          %v606 = vadd.f32 %v602, 1e-05
          %v607 = vadd.f32 %v603, 1e-05
          %v608 = vadd.f32 %v604, 1e-05
          %v609 = vrsqrt.pop %v605
          %v610 = vrsqrt.pop %v606
          %v611 = vrsqrt.pop %v607
          %v612 = vrsqrt.pop %v608
          %v613 = vmul.f32 %v585, %v609
          %v614 = vmul.f32 %v586, %v610
          %v615 = vmul.f32 %v587, %v611
          %v616 = vmul.f32 %v588, %v612
          %v618 = vlaneseq
          %v619 = vshrl.u32 %v618, 7
          %v620 = vsub.s32 0, %v619
          %v621 = vrot.slane %v570, %v620
          %v623 = vmul.f32 %v613, %v621
          %v624 = vmul.f32 %v614, %v621
          %v625 = vmul.f32 %v615, %v621
          %v626 = vmul.f32 %v616, %v621
          %v628 = vlaneseq
          %v629 = vshrl.u32 %v628, 7
          %v630 = vsub.s32 0, %v629
          %v631 = vrot.slane %v571, %v630
          %v633 = vadd.f32 %v623, %v631
          %v634 = vadd.f32 %v624, %v631
          %v635 = vadd.f32 %v625, %v631
          %v636 = vadd.f32 %v626, %v631
          %v637 = vld [vmem:[#allocation8] sm:$0xf]
          %v638 = vld [vmem:[#allocation8 + $0x4] sm:$0xf]
          %v639 = vld [vmem:[#allocation8 + $0x8] sm:$0xf]
          %v640 = vld [vmem:[#allocation8 + $0xc] sm:$0xf]
          %v641 = vld [vmem:[#allocation8 + $0x10] sm:$0xf]
          %v642 = vld [vmem:[#allocation8 + $0x14] sm:$0xf]
          %v643 = vld [vmem:[#allocation8 + $0x18] sm:$0xf]
          %v644 = vld [vmem:[#allocation8 + $0x1c] sm:$0xf]
          %v645 = vld [vmem:[#allocation8 + $0x20] sm:$0xf]
          %v646 = vld [vmem:[#allocation8 + $0x24] sm:$0xf]
          %v647 = vld [vmem:[#allocation8 + $0x28] sm:$0xf]
          %v648 = vld [vmem:[#allocation8 + $0x2c] sm:$0xf]
          %v649 = vld [vmem:[#allocation8 + $0x30] sm:$0xf]
          %v650 = vld [vmem:[#allocation8 + $0x34] sm:$0xf]
          %v651 = vld [vmem:[#allocation8 + $0x38] sm:$0xf]
          %v652 = vld [vmem:[#allocation8 + $0x3c] sm:$0xf]
          %v653 = vpack.c.bf16 %v634, %v633
          %v654 = vpack.c.bf16 %v636, %v635
          %v655 = vld [vmem:[%s6] sm:$0x1]
          %v657 = vlaneseq
          %v658 = vshrl.u32 %v657, 7
          %v659 = vsub.s32 0, %v658
          %v660 = vrot.slane %v655, %v659
          %v678 = vunpack.c.l.b16 %v637
          %v679 = vunpack.c.l.b16 %v638
          %v680 = vunpack.c.l.b16 %v639
          %v681 = vunpack.c.l.b16 %v640
          %v682 = vunpack.c.l.b16 %v641
          %v683 = vunpack.c.l.b16 %v642
          %v684 = vunpack.c.l.b16 %v643
          %v685 = vunpack.c.l.b16 %v644
          %v686 = vunpack.c.l.b16 %v645
          %v687 = vunpack.c.l.b16 %v646
          %v688 = vunpack.c.l.b16 %v647
          %v689 = vunpack.c.l.b16 %v648
          %v690 = vunpack.c.l.b16 %v649
          %v691 = vunpack.c.l.b16 %v650
          %v692 = vunpack.c.l.b16 %v651
          %v693 = vunpack.c.l.b16 %v652
          %v694 = vpack.c.b16 %v679, %v678
          %v695 = vpack.c.b16 %v681, %v680
          %v696 = vpack.c.b16 %v683, %v682
          %v697 = vpack.c.b16 %v685, %v684
          %v698 = vpack.c.b16 %v687, %v686
          %v699 = vpack.c.b16 %v689, %v688
          %v700 = vpack.c.b16 %v691, %v690
          %v701 = vpack.c.b16 %v693, %v692
          %710 = vmatprep.subr.bf16.mxu0 0
          %711 = vmatpush1.bf16.msra.mxu0 %v694
          %712 = vmatprep.subr.bf16.mxu0 0
          %713 = vmatpush1.bf16.msra.mxu0 %v695
          %714 = vmatprep.subr.bf16.mxu0 0
          %715 = vmatpush1.bf16.msra.mxu0 %v696
          %716 = vmatprep.subr.bf16.mxu0 0
          %717 = vmatpush1.bf16.msra.mxu0 %v697
          %718 = vmatprep.subr.bf16.mxu0 0
          %719 = vmatpush1.bf16.msra.mxu0 %v698
          %720 = vmatprep.subr.bf16.mxu0 0
          %721 = vmatpush1.bf16.msra.mxu0 %v699
          %722 = vmatprep.subr.bf16.mxu0 0
          %723 = vmatpush1.bf16.msra.mxu0 %v700
          %724 = vmatprep.subr.bf16.mxu0 0
          %725 = vmatpush1.bf16.msra.mxu0 %v701
          %726 = vmatprep.subr.bf16.mxu0 0
          %727 = vmatpush1.bf16.msra.mxu0 0
          %728 = vmatprep.subr.bf16.mxu0 0
          %729 = vmatpush1.bf16.msra.mxu0 0
          %730 = vmatprep.subr.bf16.mxu0 0
          %731 = vmatpush1.bf16.msra.mxu0 0
          %732 = vmatprep.subr.bf16.mxu0 0
          %733 = vmatpush1.bf16.msra.mxu0 0
          %734 = vmatprep.subr.bf16.mxu0 0
          %735 = vmatpush1.bf16.msra.mxu0 0
          %736 = vmatprep.subr.bf16.mxu0 0
          %737 = vmatpush1.bf16.msra.mxu0 0
          %738 = vmatprep.subr.bf16.mxu0 0
          %739 = vmatpush1.bf16.msra.mxu0 0
          %740 = vmatprep.subr.bf16.mxu0 0
          %741 = vmatpush1.bf16.msra.mxu0 0
          %742 = vmatprep.mubr.bf16.mxu0 0
          %743 = vmatmul.mubr.bf16.gmra.mrb[0].mxu0 %v653
          %v744 = vpop.f32.mrb[0].mxu0
          %v745 = vadd.f32 %v660, %v744
          %v746 = vpop.f32.mrb[0].mxu0
          %v747 = vpop.f32.mrb[0].mxu0
          %v748 = vadd.f32 %v660, %v747
          %v749 = vpop.f32.mrb[0].mxu0
          %750 = vmatprep.mubr.bf16.mxu0 0
          %751 = vmatmul.mubr.bf16.gmra.mrb[0].mxu0 %v654
          %v752 = vpop.f32.mrb[0].mxu0
          %v753 = vadd.f32 %v660, %v752
          %v754 = vpop.f32.mrb[0].mxu0
          %v755 = vpop.f32.mrb[0].mxu0
          %v756 = vadd.f32 %v660, %v755
          %v757 = vpop.f32.mrb[0].mxu0
          %758 = vdwg.mxu0
          %v759 = vpack.c.bf16 %v748, %v745
          %v760 = vpack.c.bf16 %v756, %v753
          %v763 = vunpack.c.l.b16 %v759
          %v764 = vunpack.c.h.b16 %v759
          %v765 = vunpack.c.l.b16 %v760
          %v766 = vunpack.c.h.b16 %v760
          %v767 = vpack.c.b16 %v763, %v763
          %v768 = vpack.c.b16 %v764, %v764
          %v769 = vpack.c.b16 %v765, %v765
          %v770 = vpack.c.b16 %v766, %v766
          %775 = vst [vmem:[#allocation11] sm:$0xf] %v767
          %776 = vst [vmem:[#allocation11 + $0x4] sm:$0xf] %v768
          %777 = vst [vmem:[#allocation11 + $0x8] sm:$0xf] %v769
          %778 = vst [vmem:[#allocation11 + $0xc] sm:$0xf] %v770
          %v779 = vld [vmem:[#allocation9] sm:$0xf]
          %v780 = vld [vmem:[#allocation9 + $0x4] sm:$0xf]
          %v781 = vld [vmem:[#allocation9 + $0x8] sm:$0xf]
          %v782 = vld [vmem:[#allocation9 + $0xc] sm:$0xf]
          %v783 = vld [vmem:[#allocation9 + $0x10] sm:$0xf]
          %v784 = vld [vmem:[#allocation9 + $0x14] sm:$0xf]
          %v785 = vld [vmem:[#allocation9 + $0x18] sm:$0xf]
          %v786 = vld [vmem:[#allocation9 + $0x1c] sm:$0xf]
          %v787 = vld [vmem:[#allocation9 + $0x20] sm:$0xf]
          %v788 = vld [vmem:[#allocation9 + $0x24] sm:$0xf]
          %v789 = vld [vmem:[#allocation9 + $0x28] sm:$0xf]
          %v790 = vld [vmem:[#allocation9 + $0x2c] sm:$0xf]
          %v791 = vld [vmem:[#allocation9 + $0x30] sm:$0xf]
          %v792 = vld [vmem:[#allocation9 + $0x34] sm:$0xf]
          %v793 = vld [vmem:[#allocation9 + $0x38] sm:$0xf]
          %v794 = vld [vmem:[#allocation9 + $0x3c] sm:$0xf]
          %v795 = vld [vmem:[%s8] sm:$0x1]
          %v797 = vlaneseq
          %v798 = vshrl.u32 %v797, 7
          %v799 = vsub.s32 0, %v798
          %v800 = vrot.slane %v795, %v799
          %v818 = vunpack.c.l.b16 %v779
          %v819 = vunpack.c.l.b16 %v780
          %v820 = vunpack.c.l.b16 %v781
          %v821 = vunpack.c.l.b16 %v782
          %v822 = vunpack.c.l.b16 %v783
          %v823 = vunpack.c.l.b16 %v784
          %v824 = vunpack.c.l.b16 %v785
          %v825 = vunpack.c.l.b16 %v786
          %v826 = vunpack.c.l.b16 %v787
          %v827 = vunpack.c.l.b16 %v788
          %v828 = vunpack.c.l.b16 %v789
          %v829 = vunpack.c.l.b16 %v790
          %v830 = vunpack.c.l.b16 %v791
          %v831 = vunpack.c.l.b16 %v792
          %v832 = vunpack.c.l.b16 %v793
          %v833 = vunpack.c.l.b16 %v794
          %v834 = vpack.c.b16 %v819, %v818
          %v835 = vpack.c.b16 %v821, %v820
          %v836 = vpack.c.b16 %v823, %v822
          %v837 = vpack.c.b16 %v825, %v824
          %v838 = vpack.c.b16 %v827, %v826
          %v839 = vpack.c.b16 %v829, %v828
          %v840 = vpack.c.b16 %v831, %v830
          %v841 = vpack.c.b16 %v833, %v832
          %850 = vmatprep.subr.bf16.mxu0 0
          %851 = vmatpush1.bf16.msra.mxu0 %v834
          %852 = vmatprep.subr.bf16.mxu0 0
          %853 = vmatpush1.bf16.msra.mxu0 %v835
          %854 = vmatprep.subr.bf16.mxu0 0
          %855 = vmatpush1.bf16.msra.mxu0 %v836
          %856 = vmatprep.subr.bf16.mxu0 0
          %857 = vmatpush1.bf16.msra.mxu0 %v837
          %858 = vmatprep.subr.bf16.mxu0 0
          %859 = vmatpush1.bf16.msra.mxu0 %v838
          %860 = vmatprep.subr.bf16.mxu0 0
          %861 = vmatpush1.bf16.msra.mxu0 %v839
          %862 = vmatprep.subr.bf16.mxu0 0
          %863 = vmatpush1.bf16.msra.mxu0 %v840
          %864 = vmatprep.subr.bf16.mxu0 0
          %865 = vmatpush1.bf16.msra.mxu0 %v841
          %866 = vmatprep.subr.bf16.mxu0 0
          %867 = vmatpush1.bf16.msra.mxu0 0
          %868 = vmatprep.subr.bf16.mxu0 0
          %869 = vmatpush1.bf16.msra.mxu0 0
          %870 = vmatprep.subr.bf16.mxu0 0
          %871 = vmatpush1.bf16.msra.mxu0 0
          %872 = vmatprep.subr.bf16.mxu0 0
          %873 = vmatpush1.bf16.msra.mxu0 0
          %874 = vmatprep.subr.bf16.mxu0 0
          %875 = vmatpush1.bf16.msra.mxu0 0
          %876 = vmatprep.subr.bf16.mxu0 0
          %877 = vmatpush1.bf16.msra.mxu0 0
          %878 = vmatprep.subr.bf16.mxu0 0
          %879 = vmatpush1.bf16.msra.mxu0 0
          %880 = vmatprep.subr.bf16.mxu0 0
          %881 = vmatpush1.bf16.msra.mxu0 0
          %882 = vmatprep.mubr.bf16.mxu0 0
          %883 = vmatmul.mubr.bf16.gmra.mrb[0].mxu0 %v653
          %v884 = vpop.f32.mrb[0].mxu0
          %v885 = vadd.f32 %v800, %v884
          %v886 = vpop.f32.mrb[0].mxu0
          %v887 = vpop.f32.mrb[0].mxu0
          %v888 = vadd.f32 %v800, %v887
          %v889 = vpop.f32.mrb[0].mxu0
          %890 = vmatprep.mubr.bf16.mxu0 0
          %891 = vmatmul.mubr.bf16.gmra.mrb[0].mxu0 %v654
          %v892 = vpop.f32.mrb[0].mxu0
          %v893 = vadd.f32 %v800, %v892
          %v894 = vpop.f32.mrb[0].mxu0
          %v895 = vpop.f32.mrb[0].mxu0
          %v896 = vadd.f32 %v800, %v895
          %v897 = vpop.f32.mrb[0].mxu0
          %898 = vdwg.mxu0
          %v899 = vpack.c.bf16 %v888, %v885
          %v900 = vpack.c.bf16 %v896, %v893
          %v903 = vunpack.c.l.b16 %v899
          %v904 = vunpack.c.h.b16 %v899
          %v905 = vunpack.c.l.b16 %v900
          %v906 = vunpack.c.h.b16 %v900
          %v907 = vpack.c.b16 %v903, %v903
          %v908 = vpack.c.b16 %v904, %v904
          %v909 = vpack.c.b16 %v905, %v905
          %v910 = vpack.c.b16 %v906, %v906
          %915 = vst [vmem:[#allocation12] sm:$0xf] %v907
          %916 = vst [vmem:[#allocation12 + $0x4] sm:$0xf] %v908
          %917 = vst [vmem:[#allocation12 + $0x8] sm:$0xf] %v909
          %918 = vst [vmem:[#allocation12 + $0xc] sm:$0xf] %v910
        $region80: #{tpu_custom_call.1} parent=55 // pred_fallthru
          _
        // Predicated region
        $region81: #{tpu_custom_call.1} parent=55 // pred_check
          %p919 = pneg %p243
        $region82: #{tpu_custom_call.1} parent=55 // pred_check_branch
          %921 = sbr.rel (%p919) target = $region84
        $region83: #{tpu_custom_call.1} parent=55 // pred_region
          %s923 = ssub.s32 256, 256
          %924 = vsyncadd [#allocation5], %s923
          %s925 = sshll.u32 [#allocation11], 4
          %s926 = int_to_ptr.vmem [resolvable:$true] %s925
          %931 = dma.vmem_to_hbm [thread:$0]  %s926, 256, %s9, [#allocation5], 64, 64, 4
        $region84: #{tpu_custom_call.1} parent=55 // pred_fallthru
          _
        // Predicated region
        $region85: #{tpu_custom_call.1} parent=55 // pred_check
          %p932 = pneg %p264
        $region86: #{tpu_custom_call.1} parent=55 // pred_check_branch
          %934 = sbr.rel (%p932) target = $region88
        $region87: #{tpu_custom_call.1} parent=55 // pred_region
          %s936 = ssub.s32 256, 256
          %937 = vsyncadd [#allocation13], %s936
          %s938 = sshll.u32 [#allocation12], 4
          %s939 = int_to_ptr.vmem [resolvable:$true] %s938
          %944 = dma.vmem_to_hbm [thread:$0]  %s939, 256, %s10, [#allocation13], 64, 64, 4
        $region88: #{tpu_custom_call.1} parent=55 // pred_fallthru
          _
        // Predicated region
        $region89: #{tpu_custom_call.1} parent=55 // pred_check
          %p945 = pneg %p243
        $region90: #{tpu_custom_call.1} parent=55 // pred_check_branch
          %947 = sbr.rel (%p945) target = $region92
        $region91: #{tpu_custom_call.1} parent=55 // pred_region
          %948 = dma.done [#allocation5], 256
        $region92: #{tpu_custom_call.1} parent=55 // pred_fallthru
          _
        // Predicated region
        $region93: #{tpu_custom_call.1} parent=55 // pred_check
          %p949 = pneg %p264
        $region94: #{tpu_custom_call.1} parent=55 // pred_check_branch
          %951 = sbr.rel (%p949) target = $region96
        $region95: #{tpu_custom_call.1} parent=55 // pred_region
          %952 = dma.done [#allocation13], 256
        $region96: #{tpu_custom_call.1} parent=55 // pred_fallthru
          _
      $region56: #{tpu_custom_call.1} parent=5 // pred_fallthru
        _
      %p953 = scmp.le.s32.totalorder 2, %s26
      // Predicated region
      $region97: #{tpu_custom_call.1} parent=5 // pred_check
        %p954 = pneg %p953
      $region98: #{tpu_custom_call.1} parent=5 // pred_check_branch
        %956 = sbr.rel (%p954) target = $region100
      $region99: #{tpu_custom_call.1} parent=5 // pred_region
        %s957 = ssub.s32 %s26, 2
      $region100: #{tpu_custom_call.1} parent=5 // pred_fallthru
        _
    $region6: #{tpu_custom_call.1} parent=1 // loop_footer
      %s30 = sadd.s32 1, %s26
    $region7: #{tpu_custom_call.1} parent=1 // loop_footer_branch
      %25 = sbr.rel target = $region3
    $region8: #{tpu_custom_call.1} parent=1 // loop_exit
      _
    %958 = vsyncpa [#allocation4], 1
    %s959 = scalar_lea.sflag [#allocation4], 1
    %960 = vsyncpa %s959, 1
    %961 = vsyncpa [#allocation7], 1
    %s962 = scalar_lea.sflag [#allocation7], 1
    %963 = vsyncpa %s962, 1
    %964 = vsyncpa [#allocation10], 1
    %965 = vsyncpa [#allocation5], 1
    %s966 = scalar_lea.sflag [#allocation5], 1
    %967 = vsyncpa %s966, 1
    %968 = vsyncpa [#allocation13], 1

</llo_original>
